<compile_context>
chip_gen: v7x
topology: tpu7x:2x2x1
jax: 0.10.0
libtpu: 0.0.40
codegen_flags: <defaults>
</compile_context>

<pallas_src>
import functools
import math

import numpy as np
import jax
import jax.numpy as jnp
from jax import lax
from jax.experimental import pallas as pl
from jax.experimental.pallas import tpu as pltpu

_INV_SQRT2 = 1.0 / math.sqrt(2.0)


def _readout_kernel(x_ref, w_ref, bpb_ref, o_ref):
    # x_ref:   [C, Thw]     features tile (HW on lanes)
    # w_ref:   [C_out, C]   resident projection weight (W1)
    # bpb_ref: [C_out, 1]   per-batch fused bias (W2 @ cls[b] + bias), f32
    # o_ref:   [C_out, Thw] output tile
    acc = jnp.dot(w_ref[...], x_ref[...], preferred_element_type=jnp.float32)
    acc = acc + bpb_ref[...]  # broadcast [C_out, 1] over lanes
    # Exact GELU (PyTorch nn.GELU default, approximate='none'), computed in f32
    # for parity with the reference module.
    y = 0.5 * acc * (1.0 + lax.erf(acc * _INV_SQRT2))
    o_ref[...] = y.astype(o_ref.dtype)


def _round_up(x, m):
    return ((x + m - 1) // m) * m


def _vmem_capacity_bytes():
    # Generation-aware physical VMEM (v5e/v6e: 128 MiB, v7x: 64 MiB per core).
    try:
        return int(pltpu.get_tpu_info().vmem_capacity_bytes)
    except Exception:
        return 64 * 1024 * 1024  # conservative fallback (v7x)


@functools.partial(jax.jit, static_argnames=("thw", "compute_dtype"))
def readout_concat_block(features, prefix_tokens, weight, bias, *,
                         thw=512, compute_dtype=None):
    """Forward pass of ReadoutConcatBlock.

    features:      [B, C, H, W]  (NCHW)
    prefix_tokens: [B, P, C] or None
    weight:        [C_out, in_features]  (PyTorch nn.Linear layout, in = 2C or C)
    bias:          [C_out]
    thw:           spatial (H*W) lane-tile width. Guidance (with resident weight
                   + double-buffered x/out tiles, bf16 inputs):
                     v5e (16 MiB default scoped VMEM): 512-1024
                     v6e (128 MiB VMEM):               1024-2048
                     v7x (64 MiB VMEM, 2 TCs):         512-1024 (keep grid >= 2)
    compute_dtype: optional matmul-input dtype (e.g. jnp.bfloat16). NOTE: casting
                   here costs one extra HBM pass; for full benefit feed bf16
                   features/weights directly (natively supported).
    returns:       [B, C_out, H, W] in features.dtype
    """
    b, c, h, w = features.shape
    hw = h * w
    c_out = weight.shape[0]

    # ---- Fold the cls token into a per-batch bias (kills the [B,HW,2C] concat).
    f32 = jnp.float32
    if prefix_tokens is not None:
        assert weight.shape[1] == 2 * c, "weight must be [C_out, 2*C] with prefix tokens"
        w1 = weight[:, :c]
        w2 = weight[:, c:]
        cls = prefix_tokens[:, 0]                                            # [B, C]
        bias_pb = cls.astype(f32) @ w2.astype(f32).T + bias.astype(f32)      # [B, C_out]
    else:
        assert weight.shape[1] == c, "weight must be [C_out, C] without prefix tokens"
        w1 = weight
        bias_pb = jnp.broadcast_to(bias.astype(f32), (b, c_out))
    bias_pb = bias_pb[:, :, None]                                            # [B, C_out, 1]

    kdtype = features.dtype if compute_dtype is None else compute_dtype
    out_dtype = features.dtype
    # NCHW-native: pure reshape (no transpose / extra HBM round trip).
    x = features.reshape(b, c, hw).astype(kdtype)
    w1 = w1.astype(kdtype)

    # ---- Spatial lane tile. Big tiles amortize the ~0.35us/step grid overhead;
    #      cdiv grid + Pallas partial edge blocks handle non-divisible HW
    #      (garbage lanes in the padded region are computed but never written back,
    #      and each output lane depends only on its own input lane).
    thw_eff = max(128, min(_round_up(thw, 128), _round_up(hw, 128)))
    n_t = pl.cdiv(hw, thw_eff)

    # ---- VMEM budget. The weight's index_map is constant, so it is fetched from
    #      HBM only once; the default pipeliner still keeps a second (idle) buffer
    #      for it, which the budget below accounts for.
    #      (Single-buffering it via pl.Buffered(1) would free C_out*C*itemsize
    #       bytes for a larger thw on VMEM-tight generations.)
    bpe_x = np.dtype(kdtype).itemsize
    bpe_o = np.dtype(out_dtype).itemsize
    est = (2 * c * thw_eff * bpe_x        # x tile, double buffered
           + 2 * c_out * thw_eff * bpe_o  # out tile, double buffered
           + 2 * c_out * c * bpe_x        # resident weight (+1 idle pipeline copy)
           + 2 * c_out * 128 * 4)         # per-batch bias (lane-padded, f32)
    cap = int(0.75 * _vmem_capacity_bytes())
    vmem_limit = int(min(max(32 * 1024 * 1024, 2 * est), cap))

    out = pl.pallas_call(
        _readout_kernel,
        out_shape=jax.ShapeDtypeStruct((b, c_out, hw), out_dtype),
        grid_spec=pltpu.PrefetchScalarGridSpec(
            num_scalar_prefetch=0,
            grid=(b, n_t),
            in_specs=[
                # features[b] tile: [C, thw] (HW on lanes).
                pl.BlockSpec((None, c, thw_eff), lambda bi, ti: (bi, 0, ti)),
                # Resident projection weight W1: [C_out, C] (constant block index).
                pl.BlockSpec((c_out, c), lambda bi, ti: (0, 0)),
                # Per-batch fused bias: [C_out, 1].
                pl.BlockSpec((None, c_out, 1), lambda bi, ti: (bi, 0, 0)),
            ],
            out_specs=pl.BlockSpec((None, c_out, thw_eff), lambda bi, ti: (bi, 0, ti)),
        ),
        compiler_params=pltpu.CompilerParams(
            # No reduction axis -> both grid dims parallel (megacore sharding on v7x).
            dimension_semantics=("parallel", "parallel"),
            vmem_limit_bytes=vmem_limit,
        ),
    )(x, w1, bias_pb)

    # Pure reshape back to NCHW (no transpose needed: we never left that layout).
    return out.reshape(b, c_out, h, w)


def _reference(features, prefix_tokens, weight, bias):
    """Direct translation of the PyTorch module (concat form), in f32."""
    f = features.astype(jnp.float32)
    wgt = weight.astype(jnp.float32)
    bia = bias.astype(jnp.float32)
    b, c, h, w = f.shape
    tokens = f.reshape(b, c, h * w).transpose(0, 2, 1)                    # [B, HW, C]
    if prefix_tokens is not None:
        cls = prefix_tokens[:, 0].astype(jnp.float32)                     # [B, C]
        cls = jnp.broadcast_to(cls[:, None, :], tokens.shape)
        tokens = jnp.concatenate([tokens, cls], axis=2)                   # [B, HW, 2C]
    y = tokens @ wgt.T + bia
    y = 0.5 * y * (1.0 + lax.erf(y * _INV_SQRT2))
    return y.transpose(0, 2, 1).reshape(b, c, h, w)


if __name__ == "__main__":
    key = jax.random.PRNGKey(0)
    k_feat, k_pref, k_w, k_b, k_feat2, k_pref2 = jax.random.split(key, 6)

    # ---- Test 1: f32, with prefix tokens, HW divisible by the lane tile.
    B, C, H, W = 2, 32, 16, 16          # embed_dim = 32
    in_f, out_f = 2 * C, C
    bound = 1.0 / math.sqrt(in_f)
    features = jax.random.normal(k_feat, (B, C, H, W), dtype=jnp.float32)
    prefix = jax.random.normal(k_pref, (B, 1, C), dtype=jnp.float32)
    weight = jax.random.uniform(k_w, (out_f, in_f), minval=-bound, maxval=bound,
                                dtype=jnp.float32)
    bias = jax.random.uniform(k_b, (out_f,), minval=-bound, maxval=bound,
                              dtype=jnp.float32)

    out = jax.block_until_ready(readout_concat_block(features, prefix, weight, bias))
    ref = _reference(features, prefix, weight, bias)
    assert out.shape == (B, C, H, W)
    assert jnp.allclose(out, ref, atol=1e-5, rtol=1e-5)

    # ---- Test 2: no prefix tokens (has_prefix_tokens=False -> Linear(C -> C)).
    w_noprefix = weight[:, :C]
    out2 = jax.block_until_ready(readout_concat_block(features, None, w_noprefix, bias))
    ref2 = _reference(features, None, w_noprefix, bias)
    assert jnp.allclose(out2, ref2, atol=1e-5, rtol=1e-5)

    # ---- Test 3: bf16 inputs, spatial extent NOT divisible by the tile
    #      (HW = 576, tile = 256 -> grid (2, 3), partial last block).
    H3 = W3 = 24
    features3 = jax.random.normal(k_feat2, (B, C, H3, W3),
                                  dtype=jnp.float32).astype(jnp.bfloat16)
    prefix3 = jax.random.normal(k_pref2, (B, 1, C),
                                dtype=jnp.float32).astype(jnp.bfloat16)
    weight3 = weight.astype(jnp.bfloat16)
    out3 = jax.block_until_ready(
        readout_concat_block(features3, prefix3, weight3, bias, thw=256))
    ref3 = _reference(features3, prefix3, weight3, bias)
    assert out3.shape == (B, C, H3, W3) and out3.dtype == jnp.bfloat16
    assert jnp.allclose(out3.astype(jnp.float32), ref3, atol=5e-2, rtol=5e-2)

    print("KERNEL_OK")
</pallas_src>

<mosaic_0001>
module attributes {stable_mosaic.version = 11 : i64} {
  func.func @_readout_kernel(%arg0: i32, %arg1: i32, %arg2: memref<1x32x256xf32, #tpu.memory_space<vmem>>, %arg3: memref<32x32xf32, #tpu.memory_space<vmem>>, %arg4: memref<1x32x1xf32, #tpu.memory_space<vmem>>, %arg5: memref<1x32x256xf32, #tpu.memory_space<vmem>>) attributes {dimension_semantics = [#tpu.dimension_semantics<parallel>, #tpu.dimension_semantics<parallel>], iteration_bounds = array<i64: 2, 1>, scalar_prefetch = 0 : i64, scratch_operands = 0 : i64, tpu.core_type = #tpu.core_type<tc>, window_params = [{transform_indices = @transform_0, window_bounds = array<i64: 1, 32, 256>}, {pipeline_mode = #tpu.pipeline_mode<synchronous>, transform_indices = @transform_1, window_bounds = array<i64: 32, 32>}, {transform_indices = @transform_2, window_bounds = array<i64: 1, 32, 1>}, {transform_indices = @transform_3, window_bounds = array<i64: 1, 32, 256>}]} {
    %c0 = arith.constant 0 : index
    %c0_0 = arith.constant 0 : index
    %0 = vector.load %arg3[%c0, %c0_0] : memref<32x32xf32, #tpu.memory_space<vmem>>, vector<32x32xf32>
    %c0_1 = arith.constant 0 : index
    %c0_2 = arith.constant 0 : index
    %c0_3 = arith.constant 0 : index
    %1 = vector.load %arg2[%c0_1, %c0_2, %c0_3] : memref<1x32x256xf32, #tpu.memory_space<vmem>>, vector<1x32x256xf32>
    %2 = vector.shape_cast %1 : vector<1x32x256xf32> to vector<32x256xf32>
    %cst = arith.constant dense<0.000000e+00> : vector<32x256xf32>
    %3 = tpu.matmul %0, %2, %cst {dimension_numbers = #tpu.dot_dimension_numbers<[1], [0], [0], [1], [0, 0, 1, 1], [], []>} : vector<32x32xf32>, vector<32x256xf32>, vector<32x256xf32> -> vector<32x256xf32>
    %c0_4 = arith.constant 0 : index
    %c0_5 = arith.constant 0 : index
    %c0_6 = arith.constant 0 : index
    %4 = vector.load %arg4[%c0_4, %c0_5, %c0_6] : memref<1x32x1xf32, #tpu.memory_space<vmem>>, vector<1x32x1xf32>
    %5 = vector.shape_cast %4 : vector<1x32x1xf32> to vector<32x1xf32>
    %6 = vector.broadcast %5 : vector<32x1xf32> to vector<32x256xf32>
    %7 = arith.addf %3, %6 : vector<32x256xf32>
    %cst_7 = arith.constant 5.000000e-01 : f32
    %8 = vector.broadcast %cst_7 : f32 to vector<32x256xf32>
    %9 = arith.mulf %8, %7 : vector<32x256xf32>
    %cst_8 = arith.constant 0.707106769 : f32
    %10 = vector.broadcast %cst_8 : f32 to vector<32x256xf32>
    %11 = arith.mulf %7, %10 : vector<32x256xf32>
    %12 = math.erf %11 : vector<32x256xf32>
    %cst_9 = arith.constant 1.000000e+00 : f32
    %13 = vector.broadcast %cst_9 : f32 to vector<32x256xf32>
    %14 = arith.addf %13, %12 : vector<32x256xf32>
    %15 = arith.mulf %9, %14 : vector<32x256xf32>
    %c0_10 = arith.constant 0 : index
    %c0_11 = arith.constant 0 : index
    %c0_12 = arith.constant 0 : index
    %16 = vector.load %arg5[%c0_10, %c0_11, %c0_12] : memref<1x32x256xf32, #tpu.memory_space<vmem>>, vector<1x32x256xf32>
    %17 = vector.shape_cast %16 : vector<1x32x256xf32> to vector<32x256xf32>
    %18 = vector.shape_cast %15 : vector<32x256xf32> to vector<1x32x256xf32>
    tpu.vector_store %arg5[%c0_10, %c0_11, %c0_12], %18 {strides = array<i32>} : memref<1x32x256xf32, #tpu.memory_space<vmem>>, vector<1x32x256xf32>,
    return
  }
  func.func @transform_0(%arg0: i32, %arg1: i32) -> (i32, i32, i32) {
    %c0_i32 = arith.constant 0 : i32
    %c0_i32_0 = arith.constant 0 : i32
    return %arg0, %c0_i32, %arg1 : i32, i32, i32
  }
  func.func @transform_1(%arg0: i32, %arg1: i32) -> (i32, i32) {
    %c0_i32 = arith.constant 0 : i32
    %c0_i32_0 = arith.constant 0 : i32
    %c0_i32_1 = arith.constant 0 : i32
    return %c0_i32, %c0_i32_0 : i32, i32
  }
  func.func @transform_2(%arg0: i32, %arg1: i32) -> (i32, i32, i32) {
    %c0_i32 = arith.constant 0 : i32
    %c0_i32_0 = arith.constant 0 : i32
    %c0_i32_1 = arith.constant 0 : i32
    return %arg0, %c0_i32, %c0_i32_0 : i32, i32, i32
  }
  func.func @transform_3(%arg0: i32, %arg1: i32) -> (i32, i32, i32) {
    %c0_i32 = arith.constant 0 : i32
    %c0_i32_0 = arith.constant 0 : i32
    return %arg0, %c0_i32, %arg1 : i32, i32, i32
  }
}

</mosaic_0001>

<llo_original>
// kernel: readout_concat_block.1
$region0: #{readout_concat_block.1}
  #allocation0 [shape = 'u32[]', space=smem, size = 0x4, offset = 0x4, fixed_abs, tag = 'smem constant byte address 0x4 - core index']
  #allocation1 [shape = 'u32[144,128]{1,0:T(1,128)}', space=vmem, size = 0x12000, scoped, tag = 'internal scratch']
  %s0 = inlined_call_operand.vmem [shape: f32[2,32,256], index: 0, kind: input, shape index: {}]
  %s1 = inlined_call_operand.vmem [shape: f32[32,32], index: 1, kind: input, shape index: {}]
  %s2 = inlined_call_operand.vmem [shape: f32[2,32,1], index: 2, kind: input, shape index: {}]
  %s3 = inlined_call_operand.vmem [shape: f32[2,32,256], index: 3, kind: output, shape index: {}]
  %s4 = sld [smem:[#allocation0]]
  $region45: #{readout_concat_block.1} parent=0
    _
  %s6 = ssub.s32 1, %s4
  %s7 = scalar_select 0, %s6, %s4
  loop: start=0, step=1, limit=4
  $region2: #{readout_concat_block.1} parent=0 // loop_pre_header
    _
  $region3: #{readout_concat_block.1} parent=0 // loop_header
    %s9 = sphi 0, %s13
    %p10 = scmp.ge.s32.totalorder %s9, 4
    %s16 = sphi 0, %s28
    %s17 = sphi 0, %s24
    %s18 = sphi 0, %s16
    %s19 = sphi 0, %s17
    %s20 = sphi 0, %s18
    %s21 = sphi 0, %s19
    %s33 = sphi 0, %s35
    %s36 = sphi 0, %s33
    %s37 = sphi 0, %s36
    %s53 = sphi 0, %s37
    %s57 = sphi 0, %s57
    %s59 = sphi 0, %s57
    %s60 = sphi 0, %s59
    %s74 = sphi 0, %s60
    %s80 = sphi 0, %s82
    %s83 = sphi 0, %s80
    %s84 = sphi 0, %s83
    %s100 = sphi 0, %s84
    %s108 = sphi 0, %s110
    %s111 = sphi 0, %s108
    %s112 = sphi 0, %s111
    %s128 = sphi 0, %s112
  $region4: #{readout_concat_block.1} parent=0 // loop_header_branch
    %12 = sbr.rel (%p10) target = $region8
  $region5: #{readout_concat_block.1} parent=0 // loop_body
    %s14 = ssub.s32 %s9, 1
    %s15 = ssub.s32 %s9, 2
    %s22 = sadd.s32 1, %s17
    %p23 = scmp.ge.s32.totalorder %s22, 1
    %s24 = scalar_select %p23, 0, %s22
    %s25 = sadd.s32 1, %s16
    %s26 = scalar_select %p23, %s25, %s16
    %p27 = scmp.ge.s32.totalorder %s26, 2
    %s28 = scalar_select %p27, 0, %s26
    %s29 = ssub.s32 %s16, %s28
    %s30 = ssub.s32 %s17, %s24
    %s31 = sor.u32 %s29, %s30
    %p32 = scmp.eq.s32.totalorder %s31, 0
    %s34 = sadd.s32 %s33, 1
    %s35 = scalar_select %p32, %s33, %s34
    %p38 = pneg %p32
    %p39 = scmp.eq.s32.totalorder %s9, 1
    %p40 = por %p38, %p39
    %p41 = scmp.ne.s32.totalorder %s33, %s36
    %p42 = scmp.eq.s32.totalorder %s9, 0
    %p43 = por %p41, %p42
    %p44 = scmp.ne.s32.totalorder %s33, %s36
    %p45 = scmp.eq.s32.totalorder %s14, 1
    %p46 = por %p44, %p45
    %p47 = scmp.ne.s32.totalorder %s36, %s37
    %p48 = scmp.eq.s32.totalorder %s14, 0
    %p49 = por %p47, %p48
    %p50 = scmp.ne.s32.totalorder %s36, %s37
    %p51 = scmp.eq.s32.totalorder %s15, 1
    %p52 = por %p50, %p51
    %p54 = scmp.ne.s32.totalorder %s37, %s53
    %p55 = scmp.eq.s32.totalorder %s15, 0
    %p56 = por %p54, %p55
    %s58 = sadd.s32 %s57, 1
    %p61 = scmp.eq.s32.totalorder %s9, 1
    %p62 = scmp.ne.s32.totalorder %s57, %s59
    %p63 = scmp.eq.s32.totalorder %s9, 0
    %p64 = por %p62, %p63
    %p65 = scmp.ne.s32.totalorder %s57, %s59
    %p66 = scmp.eq.s32.totalorder %s14, 1
    %p67 = por %p65, %p66
    %p68 = scmp.ne.s32.totalorder %s59, %s60
    %p69 = scmp.eq.s32.totalorder %s14, 0
    %p70 = por %p68, %p69
    %p71 = scmp.ne.s32.totalorder %s59, %s60
    %p72 = scmp.eq.s32.totalorder %s15, 1
    %p73 = por %p71, %p72
    %p75 = scmp.ne.s32.totalorder %s60, %s74
    %p76 = scmp.eq.s32.totalorder %s15, 0
    %p77 = por %p75, %p76
    %s78 = ssub.s32 %s16, %s28
    %p79 = scmp.eq.s32.totalorder %s78, 0
    %s81 = sadd.s32 %s80, 1
    %s82 = scalar_select %p79, %s80, %s81
    %p85 = pneg %p79
    %p86 = scmp.eq.s32.totalorder %s9, 1
    %p87 = por %p85, %p86
    %p88 = scmp.ne.s32.totalorder %s80, %s83
    %p89 = scmp.eq.s32.totalorder %s9, 0
    %p90 = por %p88, %p89
    %p91 = scmp.ne.s32.totalorder %s80, %s83
    %p92 = scmp.eq.s32.totalorder %s14, 1
    %p93 = por %p91, %p92
    %p94 = scmp.ne.s32.totalorder %s83, %s84
    %p95 = scmp.eq.s32.totalorder %s14, 0
    %p96 = por %p94, %p95
    %p97 = scmp.ne.s32.totalorder %s83, %s84
    %p98 = scmp.eq.s32.totalorder %s15, 1
    %p99 = por %p97, %p98
    %p101 = scmp.ne.s32.totalorder %s84, %s100
    %p102 = scmp.eq.s32.totalorder %s15, 0
    %p103 = por %p101, %p102
    %s104 = ssub.s32 %s16, %s28
    %s105 = ssub.s32 %s17, %s24
    %s106 = sor.u32 %s104, %s105
    %p107 = scmp.eq.s32.totalorder %s106, 0
    %s109 = sadd.s32 %s108, 1
    %s110 = scalar_select %p107, %s108, %s109
    %p113 = pneg %p107
    %p114 = scmp.eq.s32.totalorder %s9, 1
    %p115 = por %p113, %p114
    %p116 = scmp.ne.s32.totalorder %s108, %s111
    %p117 = scmp.eq.s32.totalorder %s9, 0
    %p118 = por %p116, %p117
    %p119 = scmp.ne.s32.totalorder %s108, %s111
    %p120 = scmp.eq.s32.totalorder %s14, 1
    %p121 = por %p119, %p120
    %p122 = scmp.ne.s32.totalorder %s111, %s112
    %p123 = scmp.eq.s32.totalorder %s14, 0
    %p124 = por %p122, %p123
    %p125 = scmp.ne.s32.totalorder %s111, %s112
    %p126 = scmp.eq.s32.totalorder %s15, 1
    %p127 = por %p125, %p126
    %p129 = scmp.ne.s32.totalorder %s112, %s128
    %p130 = scmp.eq.s32.totalorder %s15, 0
    %p131 = por %p129, %p130
    %p132 = scmp.le.s32.totalorder 1, %s9
    %p133 = scmp.lt.s32.totalorder %s9, 3
    %p134 = pnand %p132, %p133
    %p135 = pneg %p134
    // Predicated region
    $region9: #{readout_concat_block.1} parent=5 // pred_check
      _
    $region10: #{readout_concat_block.1} parent=5 // pred_check_branch
      %137 = sbr.rel (%p134) target = $region12
    $region11: #{readout_concat_block.1} parent=5 // pred_region
      %s138 = ssub.s32 %s9, 1
      // Predicated region
      $region13: #{readout_concat_block.1} parent=11 // pred_check
        %p139 = pneg %p70
      $region14: #{readout_concat_block.1} parent=11 // pred_check_branch
        %141 = sbr.rel (%p139) target = $region16
      $region15: #{readout_concat_block.1} parent=11 // pred_region
        _
      $region16: #{readout_concat_block.1} parent=11 // pred_fallthru
        _
    $region12: #{readout_concat_block.1} parent=5 // pred_fallthru
      _
    %p142 = scmp.lt.s32.totalorder %s9, 2
    // Predicated region
    $region17: #{readout_concat_block.1} parent=5 // pred_check
      %p143 = pneg %p142
    $region18: #{readout_concat_block.1} parent=5 // pred_check_branch
      %145 = sbr.rel (%p143) target = $region20
    $region19: #{readout_concat_block.1} parent=5 // pred_region
      // Predicated region
      $region21: #{readout_concat_block.1} parent=19 // pred_check
        %p146 = pneg %p43
      $region22: #{readout_concat_block.1} parent=19 // pred_check_branch
        %148 = sbr.rel (%p146) target = $region24
      $region23: #{readout_concat_block.1} parent=19 // pred_region
        %s149 = smul.u32 2, %s17
        %p150 = scmp.lt.s32.totalorder %s16, 1
        %s151 = scalar_select %p150, %s16, 1
        %p152 = scmp.lt.s32.totalorder %s149, 1
        %s153 = scalar_select %p152, %s149, 1
        %s154 = smul.addr %s151, 8
        %s155 = sadd.s32 %s153, %s154
        %s156 = smul.addr %s155, 8
        %s157 = scalar_lea.vmem %s0, %s156
        %s158 = smul.u32 2, %s17
      $region24: #{readout_concat_block.1} parent=19 // pred_fallthru
        _
      // Predicated region
      $region25: #{readout_concat_block.1} parent=19 // pred_check
        %p159 = pneg %p90
      $region26: #{readout_concat_block.1} parent=19 // pred_check_branch
        %161 = sbr.rel (%p159) target = $region28
      $region27: #{readout_concat_block.1} parent=19 // pred_region
        %p162 = scmp.lt.s32.totalorder %s16, 1
        %s163 = scalar_select %p162, %s16, 1
        %s164 = smul.addr %s163, 4
        %s165 = smul.addr %s164, 8
        %s166 = scalar_lea.vmem %s2, %s165
      $region28: #{readout_concat_block.1} parent=19 // pred_fallthru
        _
    $region20: #{readout_concat_block.1} parent=5 // pred_fallthru
      _
    %p167 = scmp.le.s32.totalorder 1, %s9
    %p168 = scmp.lt.s32.totalorder %s9, 3
    %p169 = pnand %p167, %p168
    %p170 = pneg %p169
    // Predicated region
    $region29: #{readout_concat_block.1} parent=5 // pred_check
      _
    $region30: #{readout_concat_block.1} parent=5 // pred_check_branch
      %172 = sbr.rel (%p169) target = $region32
    $region31: #{readout_concat_block.1} parent=5 // pred_region
      %s173 = ssub.s32 %s9, 1
      %s174 = smul.u32 2, %s19
      %p175 = scmp.lt.s32.totalorder %s18, 1
      %s176 = scalar_select %p175, %s18, 1
      %p177 = scmp.lt.s32.totalorder %s174, 1
      %s178 = scalar_select %p177, %s174, 1
      %s179 = smul.addr %s176, 8
      %s180 = sadd.s32 %s178, %s179
      %s181 = smul.addr %s180, 8
      %s182 = scalar_lea.vmem %s0, %s181
      %p183 = pneg %p49
      %p184 = pneg %p46
      %p185 = pneg %p70
      %p186 = pneg %p67
      %p187 = scmp.lt.s32.totalorder %s18, 1
      %s188 = scalar_select %p187, %s18, 1
      %s189 = smul.addr %s188, 4
      %s190 = smul.addr %s189, 8
      %s191 = scalar_lea.vmem %s2, %s190
      %p192 = pneg %p96
      %p193 = pneg %p93
      %p194 = pneg %p124
      %p195 = pneg %p121
      %s196 = smul.u32 2, %s19
      %p197 = scmp.lt.s32.totalorder %s18, 1
      %s198 = scalar_select %p197, %s18, 1
      %p199 = scmp.lt.s32.totalorder %s196, 1
      %s200 = scalar_select %p199, %s196, 1
      %s201 = smul.addr %s198, 8
      %s202 = sadd.s32 %s200, %s201
      %s203 = smul.addr %s202, 8
      %s204 = scalar_lea.vmem %s3, %s203
      %s205 = smul.u32 2, %s19
      %p206 = scmp.lt.s32.totalorder %s18, 1
      %s207 = scalar_select %p206, %s18, 1
      %p208 = scmp.lt.s32.totalorder %s205, 1
      %s209 = scalar_select %p208, %s205, 1
      %s210 = smul.addr %s207, 8
      %s211 = sadd.s32 %s209, %s210
      %s212 = smul.addr %s211, 8
      %s213 = scalar_lea.vmem %s0, %s212
      %s214 = smul.u32 2, %s19
      %p215 = scmp.lt.s32.totalorder %s18, 1
      %s216 = scalar_select %p215, %s18, 1
      %s217 = smul.addr %s216, 4
      %s218 = smul.addr %s217, 8
      %s219 = scalar_lea.vmem %s2, %s218
      %s220 = smul.u32 2, %s19
      %p221 = scmp.lt.s32.totalorder %s18, 1
      %s222 = scalar_select %p221, %s18, 1
      %p223 = scmp.lt.s32.totalorder %s220, 1
      %s224 = scalar_select %p223, %s220, 1
      %s225 = smul.addr %s222, 8
      %s226 = sadd.s32 %s224, %s225
      %s227 = smul.addr %s226, 8
      %s228 = scalar_lea.vmem %s3, %s227
      %s229 = smul.u32 2, %s19
      %v230 = vld [vmem:[%s1] sm:$0xff]
      %v231 = vld [vmem:[%s1 + $0x8] sm:$0xff]
      %v232 = vld [vmem:[%s1 + $0x10] sm:$0xff]
      %v233 = vld [vmem:[%s1 + $0x18] sm:$0xff]
      %v234 = vld [vmem:[%s213] sm:$0xff]
      %v235 = vld [vmem:[%s213 + $0x8] sm:$0xff]
      %v236 = vld [vmem:[%s213 + $0x10] sm:$0xff]
      %v237 = vld [vmem:[%s213 + $0x18] sm:$0xff]
      %v238 = vld [vmem:[%s213 + $0x20] sm:$0xff]
      %v239 = vld [vmem:[%s213 + $0x28] sm:$0xff]
      %v240 = vld [vmem:[%s213 + $0x30] sm:$0xff]
      %v241 = vld [vmem:[%s213 + $0x38] sm:$0xff]
      %v242 = vld [vmem:[%s219] sm:$0xff]
      %v243 = vld [vmem:[%s219 + $0x8] sm:$0xff]
      %v244 = vld [vmem:[%s219 + $0x10] sm:$0xff]
      %v245 = vld [vmem:[%s219 + $0x18] sm:$0xff]
      %247 = vset.pattern.permute.xlu0 0
      %248 = vperm.xlu0 %247, %v242
      %v249 = vpop.permute.xlu0 %248
      %252 = vset.pattern.permute.xlu0 0
      %253 = vperm.xlu0 %252, %v243
      %v254 = vpop.permute.xlu0 %253
      %257 = vset.pattern.permute.xlu0 0
      %258 = vperm.xlu0 %257, %v244
      %v259 = vpop.permute.xlu0 %258
      %262 = vset.pattern.permute.xlu0 0
      %263 = vperm.xlu0 %262, %v245
      %v264 = vpop.permute.xlu0 %263
      %vm266 = vcmask 261120
      %v268 = vsel %vm266, %v230, 0
      %v271 = vsel %vm266, %v231, 0
      %v274 = vsel %vm266, %v232, 0
      %v277 = vsel %vm266, %v233, 0
      %279 = vmatprep.subr.mxu0 %v235
      %280 = vmatpush1.msra.mxu0 %v234
      %281 = vmatprep.subr.mxu0 %v237
      %282 = vmatpush1.msra.mxu0 %v236
      %283 = vmatprep.subr.mxu0 %v239
      %284 = vmatpush1.msra.mxu0 %v238
      %285 = vmatprep.subr.mxu0 %v241
      %286 = vmatpush1.msra.mxu0 %v240
      %287 = vmatprep.subr.mxu0 0.0
      %288 = vmatpush1.msra.mxu0 0.0
      %289 = vmatprep.subr.mxu0 0.0
      %290 = vmatpush1.msra.mxu0 0.0
      %291 = vmatprep.subr.mxu0 0.0
      %292 = vmatpush1.msra.mxu0 0.0
      %293 = vmatprep.subr.mxu0 0.0
      %294 = vmatpush1.msra.mxu0 0.0
      %295 = vmatprep.subr.mxu0 0.0
      %296 = vmatpush1.msra.mxu0 0.0
      %297 = vmatprep.subr.mxu0 0.0
      %298 = vmatpush1.msra.mxu0 0.0
      %299 = vmatprep.subr.mxu0 0.0
      %300 = vmatpush1.msra.mxu0 0.0
      %301 = vmatprep.subr.mxu0 0.0
      %302 = vmatpush1.msra.mxu0 0.0
      %303 = vmatprep.subr.mxu0 0.0
      %304 = vmatpush1.msra.mxu0 0.0
      %305 = vmatprep.subr.mxu0 0.0
      %306 = vmatpush1.msra.mxu0 0.0
      %307 = vmatprep.subr.mxu0 0.0
      %308 = vmatpush1.msra.mxu0 0.0
      %309 = vmatprep.subr.mxu0 0.0
      %310 = vmatpush1.msra.mxu0 0.0
      %311 = vmatprep.subr.mxu0 0.0
      %312 = vmatpush1.msra.mxu0 0.0
      %313 = vmatprep.subr.mxu0 0.0
      %314 = vmatpush1.msra.mxu0 0.0
      %315 = vmatprep.subr.mxu0 0.0
      %316 = vmatpush1.msra.mxu0 0.0
      %317 = vmatprep.subr.mxu0 0.0
      %318 = vmatpush1.msra.mxu0 0.0
      %319 = vmatprep.subr.mxu0 0.0
      %320 = vmatpush1.msra.mxu0 0.0
      %321 = vmatprep.subr.mxu0 0.0
      %322 = vmatpush1.msra.mxu0 0.0
      %323 = vmatprep.subr.mxu0 0.0
      %324 = vmatpush1.msra.mxu0 0.0
      %325 = vmatprep.subr.mxu0 0.0
      %326 = vmatpush1.msra.mxu0 0.0
      %327 = vmatprep.subr.mxu0 0.0
      %328 = vmatpush1.msra.mxu0 0.0
      %329 = vmatprep.subr.mxu0 0.0
      %330 = vmatpush1.msra.mxu0 0.0
      %331 = vmatprep.subr.mxu0 0.0
      %332 = vmatpush1.msra.mxu0 0.0
      %333 = vmatprep.subr.mxu0 0.0
      %334 = vmatpush1.msra.mxu0 0.0
      %335 = vmatprep.subr.mxu0 0.0
      %336 = vmatpush1.msra.mxu0 0.0
      %337 = vmatprep.subr.mxu0 0.0
      %338 = vmatpush1.msra.mxu0 0.0
      %339 = vmatprep.subr.mxu0 0.0
      %340 = vmatpush1.msra.mxu0 0.0
      %341 = vmatprep.subr.mxu0 0.0
      %342 = vmatpush1.msra.mxu0 0.0
      %343 = vmatprep.mubr.f32.mxu0 0.0
      %344 = vmatmul.mubr.f32.gmra.mrb[0].mxu0 %v268
      %v345 = vpop.f32.mrb[0].mxu0
      %v346 = vadd.f32 %v249, %v345
      %v347 = vpop.f32.mrb[0].mxu0
      %v348 = vadd.f32 %v249, %v347
      %349 = vmatprep.mubr.f32.mxu0 0.0
      %350 = vmatmul.mubr.f32.gmra.mrb[0].mxu0 %v271
      %v351 = vpop.f32.mrb[0].mxu0
      %v352 = vadd.f32 %v254, %v351
      %v353 = vpop.f32.mrb[0].mxu0
      %v354 = vadd.f32 %v254, %v353
      %355 = vmatprep.mubr.f32.mxu0 0.0
      %356 = vmatmul.mubr.f32.gmra.mrb[0].mxu0 %v274
      %v357 = vpop.f32.mrb[0].mxu0
      %v358 = vadd.f32 %v259, %v357
      %v359 = vpop.f32.mrb[0].mxu0
      %v360 = vadd.f32 %v259, %v359
      %361 = vmatprep.mubr.f32.mxu0 0.0
      %362 = vmatmul.mubr.f32.gmra.mrb[0].mxu0 %v277
      %v363 = vpop.f32.mrb[0].mxu0
      %v364 = vadd.f32 %v264, %v363
      %v365 = vpop.f32.mrb[0].mxu0
      %v366 = vadd.f32 %v264, %v365
      %367 = vdwg.mxu0
      %v368 = vmul.f32 %v346, 0.5
      %v369 = vmul.f32 %v348, 0.5
      %v370 = vmul.f32 %v352, 0.5
      %v371 = vmul.f32 %v354, 0.5
      %v372 = vmul.f32 %v358, 0.5
      %v373 = vmul.f32 %v360, 0.5
      %v374 = vmul.f32 %v364, 0.5
      %v375 = vmul.f32 %v366, 0.5
      %v376 = vmul.f32 %v346, 0.70710677
      %v377 = vmul.f32 %v348, 0.70710677
      %v378 = vmul.f32 %v352, 0.70710677
      %v379 = vmul.f32 %v354, 0.70710677
      %v380 = vmul.f32 %v358, 0.70710677
      %v381 = vmul.f32 %v360, 0.70710677
      %v382 = vmul.f32 %v364, 0.70710677
      %v383 = vmul.f32 %v366, 0.70710677
      %v384 = verf.f32.pop %v376
      %v385 = verf.f32.pop %v377
      %v386 = verf.f32.pop %v378
      %v387 = verf.f32.pop %v379
      %v388 = verf.f32.pop %v380
      %v389 = verf.f32.pop %v381
      %v390 = verf.f32.pop %v382
      %v391 = verf.f32.pop %v383
      %v392 = vadd.f32 %v384, 1.0
      %v393 = vadd.f32 %v385, 1.0
      %v394 = vadd.f32 %v386, 1.0
      %v395 = vadd.f32 %v387, 1.0
      %v396 = vadd.f32 %v388, 1.0
      %v397 = vadd.f32 %v389, 1.0
      %v398 = vadd.f32 %v390, 1.0
      %v399 = vadd.f32 %v391, 1.0
      %v400 = vmul.f32 %v368, %v392
      %v401 = vmul.f32 %v369, %v393
      %v402 = vmul.f32 %v370, %v394
      %v403 = vmul.f32 %v371, %v395
      %v404 = vmul.f32 %v372, %v396
      %v405 = vmul.f32 %v373, %v397
      %v406 = vmul.f32 %v374, %v398
      %v407 = vmul.f32 %v375, %v399
      %408 = vst [vmem:[%s228] sm:$0xff] %v400
      %409 = vst [vmem:[%s228 + $0x8] sm:$0xff] %v401
      %410 = vst [vmem:[%s228 + $0x10] sm:$0xff] %v402
      %411 = vst [vmem:[%s228 + $0x18] sm:$0xff] %v403
      %412 = vst [vmem:[%s228 + $0x20] sm:$0xff] %v404
      %413 = vst [vmem:[%s228 + $0x28] sm:$0xff] %v405
      %414 = vst [vmem:[%s228 + $0x30] sm:$0xff] %v406
      %415 = vst [vmem:[%s228 + $0x38] sm:$0xff] %v407
      %s416 = smul.u32 2, %s19
      %p417 = scmp.lt.s32.totalorder %s18, 1
      %s418 = scalar_select %p417, %s18, 1
      %p419 = scmp.lt.s32.totalorder %s416, 1
      %s420 = scalar_select %p419, %s416, 1
      %s421 = smul.addr %s418, 8
      %s422 = sadd.s32 %s420, %s421
      %s423 = smul.addr %s422, 8
      %s424 = scalar_lea.vmem %s3, %s423
      // Predicated region
      $region33: #{readout_concat_block.1} parent=31 // pred_check
        %p425 = pneg %p121
      $region34: #{readout_concat_block.1} parent=31 // pred_check_branch
        %427 = sbr.rel (%p425) target = $region36
      $region35: #{readout_concat_block.1} parent=31 // pred_region
        %s428 = smul.u32 2, %s19
      $region36: #{readout_concat_block.1} parent=31 // pred_fallthru
        _
    $region32: #{readout_concat_block.1} parent=5 // pred_fallthru
      _
    %p429 = scmp.le.s32.totalorder 2, %s9
    // Predicated region
    $region37: #{readout_concat_block.1} parent=5 // pred_check
      %p430 = pneg %p429
    $region38: #{readout_concat_block.1} parent=5 // pred_check_branch
      %432 = sbr.rel (%p430) target = $region40
    $region39: #{readout_concat_block.1} parent=5 // pred_region
      %s433 = ssub.s32 %s9, 2
      // Predicated region
      $region41: #{readout_concat_block.1} parent=39 // pred_check
        %p434 = pneg %p127
      $region42: #{readout_concat_block.1} parent=39 // pred_check_branch
        %436 = sbr.rel (%p434) target = $region44
      $region43: #{readout_concat_block.1} parent=39 // pred_region
        %s437 = smul.u32 2, %s21
        %p438 = scmp.lt.s32.totalorder %s20, 1
        %s439 = scalar_select %p438, %s20, 1
        %p440 = scmp.lt.s32.totalorder %s437, 1
        %s441 = scalar_select %p440, %s437, 1
        %s442 = smul.addr %s439, 8
        %s443 = sadd.s32 %s441, %s442
        %s444 = smul.addr %s443, 8
        %s445 = scalar_lea.vmem %s3, %s444
      $region44: #{readout_concat_block.1} parent=39 // pred_fallthru
        _
    $region40: #{readout_concat_block.1} parent=5 // pred_fallthru
      _
  $region6: #{readout_concat_block.1} parent=0 // loop_footer
    %s13 = sadd.s32 1, %s9
  $region7: #{readout_concat_block.1} parent=0 // loop_footer_branch
    %8 = sbr.rel target = $region3
  $region8: #{readout_concat_block.1} parent=0 // loop_exit
    _

</llo_original>
